<compile_context>
chip_gen: v6e
topology: v6e:2x2x1
jax: 0.10.0
libtpu: 0.0.40
codegen_flags: <defaults>
</compile_context>

<pallas_src>
import functools

import jax
import jax.numpy as jnp
from jax.experimental import pallas as pl
from jax.experimental.pallas import tpu as pltpu


# ---------------------------------------------------------------------------
# Tiling helpers
# ---------------------------------------------------------------------------

def _round_up(x, m):
    return (x + m - 1) // m * m


def _choose_tiling(b, padded_bytes_per_batch, tile_bytes_target, *, min_steps=4):
    """Pick batch-tile size TB, grid steps, and a scoped VMEM limit.

    `padded_bytes_per_batch` is the combined (input + output) VMEM footprint of
    one batch element *after* (8,128) layout padding.
    """
    tb = max(1, int(tile_bytes_target) // int(padded_bytes_per_batch))
    # Keep at least `min_steps` grid steps so a v7x chip can shard the
    # "parallel" axis across both TensorCores and the pipeline can overlap.
    tb = min(tb, max(1, pl.cdiv(b, min_steps)))
    if tb < b:
        # (8,128) rule: a block's second-minor dim must be a multiple of 8
        # unless it equals the full array dim (relevant for the flat path,
        # where TB is the second-minor block dim).
        tb = max(8, (tb // 8) * 8)
    tb = min(tb, b)
    num_steps = pl.cdiv(b, tb)
    tile_bytes = tb * padded_bytes_per_batch
    # Double-buffered in+out tiles plus headroom; stay well under v7x's 64 MiB.
    vmem_limit = min(max(2 * tile_bytes + (2 << 20), 16 << 20), 32 << 20)
    return tb, num_steps, int(vmem_limit)


# ---------------------------------------------------------------------------
# Kernels
# ---------------------------------------------------------------------------

def _flat_kernel(x_ref, o_ref, *, fdim, tdim):
    # x_ref: (TB, fdim*tdim) lane-dense tile, o_ref: (TB, tdim*fdim) tile.
    tb = x_ref.shape[0]
    x = x_ref[...]                                    # full-width load
    x3 = jnp.reshape(x, (tb, fdim, tdim))             # in-register split
    y3 = jnp.transpose(x3, (0, 2, 1))                 # batched minor transpose (XLU)
    o_ref[...] = jnp.reshape(y3, (tb, tdim * fdim))   # full-width store


def _blocked_kernel(x_ref, o_ref):
    # x_ref: (TB, fdim, tdim), o_ref: (TB, tdim, fdim). Proven-lowering path.
    o_ref[...] = jnp.transpose(x_ref[...], (0, 2, 1))


# ---------------------------------------------------------------------------
# pallas_call wrappers
# ---------------------------------------------------------------------------

def _transpose_flat(x_flat, fdim, tdim, tile_bytes_target):
    b, d = x_flat.shape
    itemsize = jnp.dtype(x_flat.dtype).itemsize
    padded_row = _round_up(d, 128) * itemsize          # lane-padded bytes / row
    tb, num_steps, vmem_limit = _choose_tiling(b, 2 * padded_row, tile_bytes_target)
    return pl.pallas_call(
        functools.partial(_flat_kernel, fdim=fdim, tdim=tdim),
        out_shape=jax.ShapeDtypeStruct((b, d), x_flat.dtype),
        grid=(num_steps,),
        in_specs=[pl.BlockSpec((tb, d), lambda i: (i, 0))],
        out_specs=pl.BlockSpec((tb, d), lambda i: (i, 0)),
        compiler_params=pltpu.CompilerParams(
            dimension_semantics=("parallel",),
            vmem_limit_bytes=vmem_limit,
        ),
        cost_estimate=pl.CostEstimate(
            flops=0, transcendentals=0, bytes_accessed=2 * b * d * itemsize),
    )(x_flat)


def _transpose_blocked(x3, fdim, tdim, tile_bytes_target):
    b = x3.shape[0]
    itemsize = jnp.dtype(x3.dtype).itemsize
    # Size from PADDED per-batch VMEM bytes (each matrix pads to (8,128) tiles).
    in_pb = _round_up(fdim, 8) * _round_up(tdim, 128) * itemsize
    out_pb = _round_up(tdim, 8) * _round_up(fdim, 128) * itemsize
    tb, num_steps, vmem_limit = _choose_tiling(b, in_pb + out_pb, tile_bytes_target)
    return pl.pallas_call(
        _blocked_kernel,
        out_shape=jax.ShapeDtypeStruct((b, tdim, fdim), x3.dtype),
        grid=(num_steps,),
        in_specs=[pl.BlockSpec((tb, fdim, tdim), lambda i: (i, 0, 0))],
        out_specs=pl.BlockSpec((tb, tdim, fdim), lambda i: (i, 0, 0)),
        compiler_params=pltpu.CompilerParams(
            dimension_semantics=("parallel",),
            vmem_limit_bytes=vmem_limit,
        ),
        cost_estimate=pl.CostEstimate(
            flops=0, transcendentals=0,
            bytes_accessed=2 * b * fdim * tdim * itemsize),
    )(x3)


_FLAT_PATH_OK = {}   # (fdim, tdim, dtype) -> bool; avoid retrying a failed lowering


def transpose_squeeze(x, fdim, tdim, *, tile_bytes_target=4 << 20):
    """Pallas equivalent of x.view(-1, fdim, tdim).transpose(-1, -2)."""
    x_flat = jnp.reshape(x, (-1, fdim * tdim))         # free (contiguous) view
    b = x_flat.shape[0]

    key = (fdim, tdim, str(jnp.dtype(x.dtype)))
    if _FLAT_PATH_OK.get(key, True):
        try:
            y_flat = _transpose_flat(x_flat, fdim, tdim, tile_bytes_target)
            _FLAT_PATH_OK[key] = True
            return jnp.reshape(y_flat, (b, tdim, fdim))  # free view
        except Exception:
            # This Mosaic toolchain could not lower the in-register minor-dim
            # reshape of the lane-dense path; fall back to the blocked kernel.
            _FLAT_PATH_OK[key] = False

    x3 = jnp.reshape(x_flat, (b, fdim, tdim))
    return _transpose_blocked(x3, fdim, tdim, tile_bytes_target)


if __name__ == "__main__":
    # Module config (TransposeSqueeze has no learnable parameters).
    fdim, tdim = 16, 32
    batch = 2

    key = jax.random.PRNGKey(0)
    x = jax.random.normal(key, (batch, fdim, tdim), dtype=jnp.float32)

    y = jax.block_until_ready(transpose_squeeze(x, fdim, tdim))
    y_ref = jnp.swapaxes(jnp.reshape(x, (-1, fdim, tdim)), -1, -2)
    assert y.shape == (batch, tdim, fdim), y.shape
    assert jnp.array_equal(y, y_ref), "mismatch vs reference (small batch)"

    # Ragged batch: forces multiple grid steps (TB=8) and a padded tail block.
    batch2 = 37
    x2 = jax.random.normal(jax.random.PRNGKey(1), (batch2, fdim * tdim),
                           dtype=jnp.float32)
    y2 = jax.block_until_ready(
        transpose_squeeze(x2, fdim, tdim,
                          tile_bytes_target=8 * 2 * fdim * tdim * 4))
    y2_ref = jnp.swapaxes(jnp.reshape(x2, (-1, fdim, tdim)), -1, -2)
    assert y2.shape == (batch2, tdim, fdim), y2.shape
    assert jnp.array_equal(y2, y2_ref), "mismatch vs reference (ragged batch)"

    print("KERNEL_OK")
</pallas_src>

<mosaic_0001>
module attributes {stable_mosaic.version = 11 : i64} {
  func.func @_flat_kernel(%arg0: i32, %arg1: memref<2x512xf32, #tpu.memory_space<vmem>>, %arg2: memref<2x512xf32, #tpu.memory_space<vmem>>) attributes {dimension_semantics = [#tpu.dimension_semantics<parallel>], iteration_bounds = array<i64: 1>, scalar_prefetch = 0 : i64, scratch_operands = 0 : i64, tpu.core_type = #tpu.core_type<tc>, window_params = [{transform_indices = @transform_0, window_bounds = array<i64: 2, 512>}, {transform_indices = @transform_1, window_bounds = array<i64: 2, 512>}]} {
    %c0 = arith.constant 0 : index
    %c0_0 = arith.constant 0 : index
    %0 = vector.load %arg1[%c0, %c0_0] : memref<2x512xf32, #tpu.memory_space<vmem>>, vector<2x512xf32>
    %1 = vector.shape_cast %0 : vector<2x512xf32> to vector<2x16x32xf32>
    %2 = tpu.transpose %1, [0, 2, 1] : vector<2x16x32xf32> -> vector<2x32x16xf32>
    %3 = vector.shape_cast %2 : vector<2x32x16xf32> to vector<2x512xf32>
    %c0_1 = arith.constant 0 : index
    %c0_2 = arith.constant 0 : index
    %4 = vector.load %arg2[%c0_1, %c0_2] : memref<2x512xf32, #tpu.memory_space<vmem>>, vector<2x512xf32>
    tpu.vector_store %arg2[%c0_1, %c0_2], %3 {strides = array<i32>} : memref<2x512xf32, #tpu.memory_space<vmem>>, vector<2x512xf32>,
    return
  }
  func.func @transform_0(%arg0: i32) -> (i32, i32) {
    %c0_i32 = arith.constant 0 : i32
    %c0_i32_0 = arith.constant 0 : i32
    return %arg0, %c0_i32 : i32, i32
  }
  func.func @transform_1(%arg0: i32) -> (i32, i32) {
    %c0_i32 = arith.constant 0 : i32
    %c0_i32_0 = arith.constant 0 : i32
    return %arg0, %c0_i32 : i32, i32
  }
}

module attributes {stable_mosaic.version = 11 : i64} {
  func.func @_blocked_kernel(%arg0: i32, %arg1: memref<2x16x32xf32, #tpu.memory_space<vmem>>, %arg2: memref<2x32x16xf32, #tpu.memory_space<vmem>>) attributes {dimension_semantics = [#tpu.dimension_semantics<parallel>], iteration_bounds = array<i64: 1>, scalar_prefetch = 0 : i64, scratch_operands = 0 : i64, tpu.core_type = #tpu.core_type<tc>, window_params = [{transform_indices = @transform_0, window_bounds = array<i64: 2, 16, 32>}, {transform_indices = @transform_1, window_bounds = array<i64: 2, 32, 16>}]} {
    %c0 = arith.constant 0 : index
    %c0_0 = arith.constant 0 : index
    %c0_1 = arith.constant 0 : index
    %0 = vector.load %arg1[%c0, %c0_0, %c0_1] : memref<2x16x32xf32, #tpu.memory_space<vmem>>, vector<2x16x32xf32>
    %1 = tpu.transpose %0, [0, 2, 1] : vector<2x16x32xf32> -> vector<2x32x16xf32>
    %c0_2 = arith.constant 0 : index
    %c0_3 = arith.constant 0 : index
    %c0_4 = arith.constant 0 : index
    %2 = vector.load %arg2[%c0_2, %c0_3, %c0_4] : memref<2x32x16xf32, #tpu.memory_space<vmem>>, vector<2x32x16xf32>
    tpu.vector_store %arg2[%c0_2, %c0_3, %c0_4], %1 {strides = array<i32>} : memref<2x32x16xf32, #tpu.memory_space<vmem>>, vector<2x32x16xf32>,
    return
  }
  func.func @transform_0(%arg0: i32) -> (i32, i32, i32) {
    %c0_i32 = arith.constant 0 : i32
    %c0_i32_0 = arith.constant 0 : i32
    %c0_i32_1 = arith.constant 0 : i32
    return %arg0, %c0_i32, %c0_i32_0 : i32, i32, i32
  }
  func.func @transform_1(%arg0: i32) -> (i32, i32, i32) {
    %c0_i32 = arith.constant 0 : i32
    %c0_i32_0 = arith.constant 0 : i32
    %c0_i32_1 = arith.constant 0 : i32
    return %arg0, %c0_i32, %c0_i32_0 : i32, i32, i32
  }
}

</mosaic_0001>

<llo_original>
// kernel: tpu_custom_call.1
$region0: #{tpu_custom_call.1}
  #allocation0 [shape = 'u32[]', space=smem, size = 0x4, offset = 0x4, fixed_abs, tag = 'smem constant byte address 0x4 - core index']
  #allocation1 [shape = 'u32[144,128]{1,0:T(1,128)}', space=vmem, size = 0x12000, scoped, tag = 'internal scratch']
  %s0 = inlined_call_operand.hbm [shape: f32[2,512], index: 0, kind: input, shape index: {}]
  %s1 = inlined_call_operand.hbm [shape: f32[2,512], index: 1, kind: output, shape index: {}]
  %s2 = sld [smem:[#allocation0]]
  $region18: #{tpu_custom_call.1} parent=0
    _
  %s4 = ssub.s32 1, %s2
  %s5 = scalar_select 0, %s4, %s2
  $region1: #{tpu_custom_call.1} parent=0
    #allocation2 [shape = 'u8[4096]{0}', space=vmem, size = 0x1000, scoped, tag = 'input window, operand 0, single buffered']
    #allocation3 [shape = 's32[1]{0}', space=sflag, size = 0x4, scoped, tag = 'scoped memory for tpu_custom_call.1']
    #allocation4 [shape = 's32[1]{0}', space=sflag, size = 0x4, scoped, tag = 'scoped memory for tpu_custom_call.1']
    #allocation5 [shape = 'u8[4096]{0}', space=vmem, size = 0x1000, scoped, tag = 'output window, operand 0, single buffered']
    %6 = vsyncpa [#allocation3], 0
    %7 = vsyncpa [#allocation4], 0
    // Predicated region
    $region2: #{tpu_custom_call.1} parent=1 // pred_check
      _
    $region3: #{tpu_custom_call.1} parent=1 // pred_check_branch
      %9 = sbr.rel (0) target = $region5
    $region4: #{tpu_custom_call.1} parent=1 // pred_region
      %s11 = ssub.s32 128, 128
      %12 = vsyncadd [#allocation3], %s11
      %s14 = sshll.u32 [#allocation2], 4
      %s15 = int_to_ptr.vmem [resolvable:$true] %s14
      %17 = dma.hbm_to_vmem [thread:$0]  %s0, 128, %s15, [#allocation3]
    $region5: #{tpu_custom_call.1} parent=1 // pred_fallthru
      _
    // Predicated region
    $region6: #{tpu_custom_call.1} parent=1 // pred_check
      _
    $region7: #{tpu_custom_call.1} parent=1 // pred_check_branch
      %19 = sbr.rel (0) target = $region9
    $region8: #{tpu_custom_call.1} parent=1 // pred_region
      %20 = dma.done [#allocation3], 128
    $region9: #{tpu_custom_call.1} parent=1 // pred_fallthru
      _
    %v21 = vld [vmem:[#allocation2] sm:$0xff]
    %v23 = vrot.slane %v21, 2
    %25 = vrot.lane.b32.xlu0 %v21, 96
    %v26 = vpop.permute.xlu0 %25
    %v27 = vrot.slane %v26, 2
    %29 = vrot.lane.b32.xlu0 %v21, 64
    %v30 = vpop.permute.xlu0 %29
    %v31 = vrot.slane %v30, 2
    %33 = vrot.lane.b32.xlu0 %v21, 32
    %v34 = vpop.permute.xlu0 %33
    %v35 = vrot.slane %v34, 2
    %v37 = vrot.slane %v21, 4
    %v39 = vrot.slane %v26, 4
    %v41 = vrot.slane %v30, 4
    %v43 = vrot.slane %v34, 4
    %v45 = vrot.slane %v21, 6
    %v47 = vrot.slane %v26, 6
    %v49 = vrot.slane %v30, 6
    %v51 = vrot.slane %v34, 6
    %v56 = vcombine.low %v21, %v26
    %v58 = vunpack.c.l.s4 1934713408
    %v59 = vunpack.c.0.s8 %v58
    %v60 = vlaneseq
    %v61 = vshrl.u32 %v60, 7
    %v62 = vsub.s32 %v59, %v61
    %v63 = vrot.slane %v56, %v62
    %v64 = vcombine.high %v63, 0.0
    %v65 = vcombine.low %v30, %v34
    %v67 = vunpack.c.l.s4 1934713408
    %v68 = vunpack.c.0.s8 %v67
    %v69 = vlaneseq
    %v70 = vshrl.u32 %v69, 7
    %v71 = vsub.s32 %v68, %v70
    %v72 = vrot.slane %v65, %v71
    %v73 = vcombine.high %v72, 0.0
    %v74 = vcombine.low %v23, %v27
    %v76 = vunpack.c.l.s4 1934713408
    %v77 = vunpack.c.0.s8 %v76
    %v78 = vlaneseq
    %v79 = vshrl.u32 %v78, 7
    %v80 = vsub.s32 %v77, %v79
    %v81 = vrot.slane %v74, %v80
    %v82 = vcombine.high %v81, 0.0
    %v83 = vcombine.low %v31, %v35
    %v85 = vunpack.c.l.s4 1934713408
    %v86 = vunpack.c.0.s8 %v85
    %v87 = vlaneseq
    %v88 = vshrl.u32 %v87, 7
    %v89 = vsub.s32 %v86, %v88
    %v90 = vrot.slane %v83, %v89
    %v91 = vcombine.high %v90, 0.0
    %v92 = vcombine.low %v37, %v39
    %v94 = vunpack.c.l.s4 1934713408
    %v95 = vunpack.c.0.s8 %v94
    %v96 = vlaneseq
    %v97 = vshrl.u32 %v96, 7
    %v98 = vsub.s32 %v95, %v97
    %v99 = vrot.slane %v92, %v98
    %v100 = vcombine.high %v99, 0.0
    %v101 = vcombine.low %v41, %v43
    %v103 = vunpack.c.l.s4 1934713408
    %v104 = vunpack.c.0.s8 %v103
    %v105 = vlaneseq
    %v106 = vshrl.u32 %v105, 7
    %v107 = vsub.s32 %v104, %v106
    %v108 = vrot.slane %v101, %v107
    %v109 = vcombine.high %v108, 0.0
    %v110 = vcombine.low %v45, %v47
    %v112 = vunpack.c.l.s4 1934713408
    %v113 = vunpack.c.0.s8 %v112
    %v114 = vlaneseq
    %v115 = vshrl.u32 %v114, 7
    %v116 = vsub.s32 %v113, %v115
    %v117 = vrot.slane %v110, %v116
    %v118 = vcombine.high %v117, 0.0
    %v119 = vcombine.low %v49, %v51
    %v121 = vunpack.c.l.s4 1934713408
    %v122 = vunpack.c.0.s8 %v121
    %v123 = vlaneseq
    %v124 = vshrl.u32 %v123, 7
    %v125 = vsub.s32 %v122, %v124
    %v126 = vrot.slane %v119, %v125
    %v127 = vcombine.high %v126, 0.0
    %v144 = vcombine.low %v63, %v72
    %v145 = vcombine.low %v81, %v90
    %v147 = vunpack.c.l.s4 1983009808
    %v148 = vunpack.c.0.s8 %v147
    %v149 = vlaneseq
    %v150 = vshrl.u32 %v149, 7
    %v151 = vsub.s32 %v148, %v150
    %v152 = vrot.slane %v144, %v151
    %v154 = vunpack.c.l.s4 1983009808
    %v155 = vunpack.c.0.s8 %v154
    %v156 = vlaneseq
    %v157 = vshrl.u32 %v156, 7
    %v158 = vsub.s32 %v155, %v157
    %v159 = vrot.slane %v145, %v158
    %v160 = vcombine.low %v152, %v159
    %v161 = vcombine.low %v99, %v108
    %v162 = vcombine.low %v117, %v126
    %v164 = vunpack.c.l.s4 1983009808
    %v165 = vunpack.c.0.s8 %v164
    %v166 = vlaneseq
    %v167 = vshrl.u32 %v166, 7
    %v168 = vsub.s32 %v165, %v167
    %v169 = vrot.slane %v161, %v168
    %v171 = vunpack.c.l.s4 1983009808
    %v172 = vunpack.c.0.s8 %v171
    %v173 = vlaneseq
    %v174 = vshrl.u32 %v173, 7
    %v175 = vsub.s32 %v172, %v174
    %v176 = vrot.slane %v162, %v175
    %v177 = vcombine.low %v169, %v176
    %v178 = vcombine.low %v64, %v73
    %v179 = vcombine.low %v82, %v91
    %v181 = vunpack.c.l.s4 1983009808
    %v182 = vunpack.c.0.s8 %v181
    %v183 = vlaneseq
    %v184 = vshrl.u32 %v183, 7
    %v185 = vsub.s32 %v182, %v184
    %v186 = vrot.slane %v178, %v185
    %v188 = vunpack.c.l.s4 1983009808
    %v189 = vunpack.c.0.s8 %v188
    %v190 = vlaneseq
    %v191 = vshrl.u32 %v190, 7
    %v192 = vsub.s32 %v189, %v191
    %v193 = vrot.slane %v179, %v192
    %v194 = vcombine.low %v186, %v193
    %v195 = vcombine.low %v100, %v109
    %v196 = vcombine.low %v118, %v127
    %v198 = vunpack.c.l.s4 1983009808
    %v199 = vunpack.c.0.s8 %v198
    %v200 = vlaneseq
    %v201 = vshrl.u32 %v200, 7
    %v202 = vsub.s32 %v199, %v201
    %v203 = vrot.slane %v195, %v202
    %v205 = vunpack.c.l.s4 1983009808
    %v206 = vunpack.c.0.s8 %v205
    %v207 = vlaneseq
    %v208 = vshrl.u32 %v207, 7
    %v209 = vsub.s32 %v206, %v208
    %v210 = vrot.slane %v196, %v209
    %v211 = vcombine.low %v203, %v210
    %216 = vxpose.xlu0.b32.start [1/16] %v160, 128
    %217 = vxpose.xlu0.b32.cont [2/16] %v177, 128
    %218 = vxpose.xlu0.b32.cont [3/16] 0.0, 128
    %219 = vxpose.xlu0.b32.cont [4/16] 0.0, 128
    %220 = vxpose.xlu0.b32.cont [5/16] 0.0, 128
    %221 = vxpose.xlu0.b32.cont [6/16] 0.0, 128
    %222 = vxpose.xlu0.b32.cont [7/16] 0.0, 128
    %223 = vxpose.xlu0.b32.cont [8/16] 0.0, 128
    %224 = vxpose.xlu0.b32.cont [9/16] 0.0, 128
    %225 = vxpose.xlu0.b32.cont [10/16] 0.0, 128
    %226 = vxpose.xlu0.b32.cont [11/16] 0.0, 128
    %227 = vxpose.xlu0.b32.cont [12/16] 0.0, 128
    %228 = vxpose.xlu0.b32.cont [13/16] 0.0, 128
    %229 = vxpose.xlu0.b32.cont [14/16] 0.0, 128
    %230 = vxpose.xlu0.b32.cont [15/16] 0.0, 128
    %231 = vxpose.xlu0.b32.end [16/16] 0.0, 128
    %v232 = vpop.trf.xlu0
    %v233 = vpop.trf.xlu0
    %v234 = vpop.trf.xlu0
    %v235 = vpop.trf.xlu0
    %v236 = vpop.trf.xlu0
    %v237 = vpop.trf.xlu0
    %v238 = vpop.trf.xlu0
    %v239 = vpop.trf.xlu0
    %v240 = vpop.trf.xlu0
    %v241 = vpop.trf.xlu0
    %v242 = vpop.trf.xlu0
    %v243 = vpop.trf.xlu0
    %v244 = vpop.trf.xlu0
    %v245 = vpop.trf.xlu0
    %v246 = vpop.trf.xlu0
    %v247 = vpop.trf.xlu0
    %248 = vxpose.xlu0.b32.start [1/16] %v194, 128
    %249 = vxpose.xlu0.b32.cont [2/16] %v211, 128
    %250 = vxpose.xlu0.b32.cont [3/16] 0.0, 128
    %251 = vxpose.xlu0.b32.cont [4/16] 0.0, 128
    %252 = vxpose.xlu0.b32.cont [5/16] 0.0, 128
    %253 = vxpose.xlu0.b32.cont [6/16] 0.0, 128
    %254 = vxpose.xlu0.b32.cont [7/16] 0.0, 128
    %255 = vxpose.xlu0.b32.cont [8/16] 0.0, 128
    %256 = vxpose.xlu0.b32.cont [9/16] 0.0, 128
    %257 = vxpose.xlu0.b32.cont [10/16] 0.0, 128
    %258 = vxpose.xlu0.b32.cont [11/16] 0.0, 128
    %259 = vxpose.xlu0.b32.cont [12/16] 0.0, 128
    %260 = vxpose.xlu0.b32.cont [13/16] 0.0, 128
    %261 = vxpose.xlu0.b32.cont [14/16] 0.0, 128
    %262 = vxpose.xlu0.b32.cont [15/16] 0.0, 128
    %263 = vxpose.xlu0.b32.end [16/16] 0.0, 128
    %v264 = vpop.trf.xlu0
    %v265 = vpop.trf.xlu0
    %v266 = vpop.trf.xlu0
    %v267 = vpop.trf.xlu0
    %v268 = vpop.trf.xlu0
    %v269 = vpop.trf.xlu0
    %v270 = vpop.trf.xlu0
    %v271 = vpop.trf.xlu0
    %v272 = vpop.trf.xlu0
    %v273 = vpop.trf.xlu0
    %v274 = vpop.trf.xlu0
    %v275 = vpop.trf.xlu0
    %v276 = vpop.trf.xlu0
    %v277 = vpop.trf.xlu0
    %v278 = vpop.trf.xlu0
    %v279 = vpop.trf.xlu0
    %v280 = vcombine.high %v232, 0.0
    %v282 = vunpack.c.l.s4 1983009808
    %v283 = vunpack.c.0.s8 %v282
    %v284 = vlaneseq
    %v285 = vshrl.u32 %v284, 7
    %v286 = vsub.s32 %v283, %v285
    %v287 = vrot.slane %v232, %v286
    %v289 = vunpack.c.l.s4 1983009808
    %v290 = vunpack.c.0.s8 %v289
    %v291 = vlaneseq
    %v292 = vshrl.u32 %v291, 7
    %v293 = vsub.s32 %v290, %v292
    %v294 = vrot.slane %v280, %v293
    %v295 = vcombine.high %v264, 0.0
    %v297 = vunpack.c.l.s4 1983009808
    %v298 = vunpack.c.0.s8 %v297
    %v299 = vlaneseq
    %v300 = vshrl.u32 %v299, 7
    %v301 = vsub.s32 %v298, %v300
    %v302 = vrot.slane %v264, %v301
    %v304 = vunpack.c.l.s4 1983009808
    %v305 = vunpack.c.0.s8 %v304
    %v306 = vlaneseq
    %v307 = vshrl.u32 %v306, 7
    %v308 = vsub.s32 %v305, %v307
    %v309 = vrot.slane %v295, %v308
    %v310 = vcombine.low %v287, %v302
    %v311 = vcombine.high %v287, %v302
    %v313 = vunpack.c.l.s4 1934713408
    %v314 = vunpack.c.0.s8 %v313
    %v315 = vlaneseq
    %v316 = vshrl.u32 %v315, 7
    %v317 = vsub.s32 %v314, %v316
    %v318 = vrot.slane %v310, %v317
    %v320 = vunpack.c.l.s4 1934713408
    %v321 = vunpack.c.0.s8 %v320
    %v322 = vlaneseq
    %v323 = vshrl.u32 %v322, 7
    %v324 = vsub.s32 %v321, %v323
    %v325 = vrot.slane %v311, %v324
    %v326 = vcombine.low %v294, %v309
    %v327 = vcombine.high %v294, %v309
    %v329 = vunpack.c.l.s4 1934713408
    %v330 = vunpack.c.0.s8 %v329
    %v331 = vlaneseq
    %v332 = vshrl.u32 %v331, 7
    %v333 = vsub.s32 %v330, %v332
    %v334 = vrot.slane %v326, %v333
    %v336 = vunpack.c.l.s4 1934713408
    %v337 = vunpack.c.0.s8 %v336
    %v338 = vlaneseq
    %v339 = vshrl.u32 %v338, 7
    %v340 = vsub.s32 %v337, %v339
    %v341 = vrot.slane %v327, %v340
    %v342 = vcombine.high %v318, 0.0
    %v343 = vcombine.high %v325, 0.0
    %v344 = vcombine.high %v334, 0.0
    %v345 = vcombine.high %v341, 0.0
    %v346 = vcombine.high %v233, 0.0
    %v348 = vunpack.c.l.s4 1983009808
    %v349 = vunpack.c.0.s8 %v348
    %v350 = vlaneseq
    %v351 = vshrl.u32 %v350, 7
    %v352 = vsub.s32 %v349, %v351
    %v353 = vrot.slane %v233, %v352
    %v355 = vunpack.c.l.s4 1983009808
    %v356 = vunpack.c.0.s8 %v355
    %v357 = vlaneseq
    %v358 = vshrl.u32 %v357, 7
    %v359 = vsub.s32 %v356, %v358
    %v360 = vrot.slane %v346, %v359
    %v361 = vcombine.high %v265, 0.0
    %v363 = vunpack.c.l.s4 1983009808
    %v364 = vunpack.c.0.s8 %v363
    %v365 = vlaneseq
    %v366 = vshrl.u32 %v365, 7
    %v367 = vsub.s32 %v364, %v366
    %v368 = vrot.slane %v265, %v367
    %v370 = vunpack.c.l.s4 1983009808
    %v371 = vunpack.c.0.s8 %v370
    %v372 = vlaneseq
    %v373 = vshrl.u32 %v372, 7
    %v374 = vsub.s32 %v371, %v373
    %v375 = vrot.slane %v361, %v374
    %v376 = vcombine.low %v353, %v368
    %v377 = vcombine.high %v353, %v368
    %v379 = vunpack.c.l.s4 1934713408
    %v380 = vunpack.c.0.s8 %v379
    %v381 = vlaneseq
    %v382 = vshrl.u32 %v381, 7
    %v383 = vsub.s32 %v380, %v382
    %v384 = vrot.slane %v376, %v383
    %v386 = vunpack.c.l.s4 1934713408
    %v387 = vunpack.c.0.s8 %v386
    %v388 = vlaneseq
    %v389 = vshrl.u32 %v388, 7
    %v390 = vsub.s32 %v387, %v389
    %v391 = vrot.slane %v377, %v390
    %v392 = vcombine.low %v360, %v375
    %v393 = vcombine.high %v360, %v375
    %v395 = vunpack.c.l.s4 1934713408
    %v396 = vunpack.c.0.s8 %v395
    %v397 = vlaneseq
    %v398 = vshrl.u32 %v397, 7
    %v399 = vsub.s32 %v396, %v398
    %v400 = vrot.slane %v392, %v399
    %v402 = vunpack.c.l.s4 1934713408
    %v403 = vunpack.c.0.s8 %v402
    %v404 = vlaneseq
    %v405 = vshrl.u32 %v404, 7
    %v406 = vsub.s32 %v403, %v405
    %v407 = vrot.slane %v393, %v406
    %v408 = vcombine.high %v384, 0.0
    %v409 = vcombine.high %v391, 0.0
    %v410 = vcombine.high %v400, 0.0
    %v411 = vcombine.high %v407, 0.0
    %v412 = vcombine.high %v234, 0.0
    %v414 = vunpack.c.l.s4 1983009808
    %v415 = vunpack.c.0.s8 %v414
    %v416 = vlaneseq
    %v417 = vshrl.u32 %v416, 7
    %v418 = vsub.s32 %v415, %v417
    %v419 = vrot.slane %v234, %v418
    %v421 = vunpack.c.l.s4 1983009808
    %v422 = vunpack.c.0.s8 %v421
    %v423 = vlaneseq
    %v424 = vshrl.u32 %v423, 7
    %v425 = vsub.s32 %v422, %v424
    %v426 = vrot.slane %v412, %v425
    %v427 = vcombine.high %v266, 0.0
    %v429 = vunpack.c.l.s4 1983009808
    %v430 = vunpack.c.0.s8 %v429
    %v431 = vlaneseq
    %v432 = vshrl.u32 %v431, 7
    %v433 = vsub.s32 %v430, %v432
    %v434 = vrot.slane %v266, %v433
    %v436 = vunpack.c.l.s4 1983009808
    %v437 = vunpack.c.0.s8 %v436
    %v438 = vlaneseq
    %v439 = vshrl.u32 %v438, 7
    %v440 = vsub.s32 %v437, %v439
    %v441 = vrot.slane %v427, %v440
    %v442 = vcombine.low %v419, %v434
    %v443 = vcombine.high %v419, %v434
    %v445 = vunpack.c.l.s4 1934713408
    %v446 = vunpack.c.0.s8 %v445
    %v447 = vlaneseq
    %v448 = vshrl.u32 %v447, 7
    %v449 = vsub.s32 %v446, %v448
    %v450 = vrot.slane %v442, %v449
    %v452 = vunpack.c.l.s4 1934713408
    %v453 = vunpack.c.0.s8 %v452
    %v454 = vlaneseq
    %v455 = vshrl.u32 %v454, 7
    %v456 = vsub.s32 %v453, %v455
    %v457 = vrot.slane %v443, %v456
    %v458 = vcombine.low %v426, %v441
    %v459 = vcombine.high %v426, %v441
    %v461 = vunpack.c.l.s4 1934713408
    %v462 = vunpack.c.0.s8 %v461
    %v463 = vlaneseq
    %v464 = vshrl.u32 %v463, 7
    %v465 = vsub.s32 %v462, %v464
    %v466 = vrot.slane %v458, %v465
    %v468 = vunpack.c.l.s4 1934713408
    %v469 = vunpack.c.0.s8 %v468
    %v470 = vlaneseq
    %v471 = vshrl.u32 %v470, 7
    %v472 = vsub.s32 %v469, %v471
    %v473 = vrot.slane %v459, %v472
    %v474 = vcombine.high %v450, 0.0
    %v475 = vcombine.high %v457, 0.0
    %v476 = vcombine.high %v466, 0.0
    %v477 = vcombine.high %v473, 0.0
    %v478 = vcombine.high %v235, 0.0
    %v480 = vunpack.c.l.s4 1983009808
    %v481 = vunpack.c.0.s8 %v480
    %v482 = vlaneseq
    %v483 = vshrl.u32 %v482, 7
    %v484 = vsub.s32 %v481, %v483
    %v485 = vrot.slane %v235, %v484
    %v487 = vunpack.c.l.s4 1983009808
    %v488 = vunpack.c.0.s8 %v487
    %v489 = vlaneseq
    %v490 = vshrl.u32 %v489, 7
    %v491 = vsub.s32 %v488, %v490
    %v492 = vrot.slane %v478, %v491
    %v493 = vcombine.high %v267, 0.0
    %v495 = vunpack.c.l.s4 1983009808
    %v496 = vunpack.c.0.s8 %v495
    %v497 = vlaneseq
    %v498 = vshrl.u32 %v497, 7
    %v499 = vsub.s32 %v496, %v498
    %v500 = vrot.slane %v267, %v499
    %v502 = vunpack.c.l.s4 1983009808
    %v503 = vunpack.c.0.s8 %v502
    %v504 = vlaneseq
    %v505 = vshrl.u32 %v504, 7
    %v506 = vsub.s32 %v503, %v505
    %v507 = vrot.slane %v493, %v506
    %v508 = vcombine.low %v485, %v500
    %v509 = vcombine.high %v485, %v500
    %v511 = vunpack.c.l.s4 1934713408
    %v512 = vunpack.c.0.s8 %v511
    %v513 = vlaneseq
    %v514 = vshrl.u32 %v513, 7
    %v515 = vsub.s32 %v512, %v514
    %v516 = vrot.slane %v508, %v515
    %v518 = vunpack.c.l.s4 1934713408
    %v519 = vunpack.c.0.s8 %v518
    %v520 = vlaneseq
    %v521 = vshrl.u32 %v520, 7
    %v522 = vsub.s32 %v519, %v521
    %v523 = vrot.slane %v509, %v522
    %v524 = vcombine.low %v492, %v507
    %v525 = vcombine.high %v492, %v507
    %v527 = vunpack.c.l.s4 1934713408
    %v528 = vunpack.c.0.s8 %v527
    %v529 = vlaneseq
    %v530 = vshrl.u32 %v529, 7
    %v531 = vsub.s32 %v528, %v530
    %v532 = vrot.slane %v524, %v531
    %v534 = vunpack.c.l.s4 1934713408
    %v535 = vunpack.c.0.s8 %v534
    %v536 = vlaneseq
    %v537 = vshrl.u32 %v536, 7
    %v538 = vsub.s32 %v535, %v537
    %v539 = vrot.slane %v525, %v538
    %v540 = vcombine.high %v516, 0.0
    %v541 = vcombine.high %v523, 0.0
    %v542 = vcombine.high %v532, 0.0
    %v543 = vcombine.high %v539, 0.0
    %545 = vrot.lane.b32.xlu0 %v342, 16
    %v546 = vpop.permute.xlu0 %545
    %549 = vrot.lane.b32.xlu0 %v325, 32
    %v550 = vpop.permute.xlu0 %549
    %553 = vrot.lane.b32.xlu0 %v343, 48
    %v554 = vpop.permute.xlu0 %553
    %557 = vrot.lane.b32.xlu0 %v334, 64
    %v558 = vpop.permute.xlu0 %557
    %561 = vrot.lane.b32.xlu0 %v344, 80
    %v562 = vpop.permute.xlu0 %561
    %565 = vrot.lane.b32.xlu0 %v341, 96
    %v566 = vpop.permute.xlu0 %565
    %569 = vrot.lane.b32.xlu0 %v345, 112
    %v570 = vpop.permute.xlu0 %569
    %573 = vrot.lane.b32.xlu0 %v408, 16
    %v574 = vpop.permute.xlu0 %573
    %577 = vrot.lane.b32.xlu0 %v391, 32
    %v578 = vpop.permute.xlu0 %577
    %581 = vrot.lane.b32.xlu0 %v409, 48
    %v582 = vpop.permute.xlu0 %581
    %585 = vrot.lane.b32.xlu0 %v400, 64
    %v586 = vpop.permute.xlu0 %585
    %589 = vrot.lane.b32.xlu0 %v410, 80
    %v590 = vpop.permute.xlu0 %589
    %593 = vrot.lane.b32.xlu0 %v407, 96
    %v594 = vpop.permute.xlu0 %593
    %597 = vrot.lane.b32.xlu0 %v411, 112
    %v598 = vpop.permute.xlu0 %597
    %601 = vrot.lane.b32.xlu0 %v474, 16
    %v602 = vpop.permute.xlu0 %601
    %605 = vrot.lane.b32.xlu0 %v457, 32
    %v606 = vpop.permute.xlu0 %605
    %609 = vrot.lane.b32.xlu0 %v475, 48
    %v610 = vpop.permute.xlu0 %609
    %613 = vrot.lane.b32.xlu0 %v466, 64
    %v614 = vpop.permute.xlu0 %613
    %617 = vrot.lane.b32.xlu0 %v476, 80
    %v618 = vpop.permute.xlu0 %617
    %621 = vrot.lane.b32.xlu0 %v473, 96
    %v622 = vpop.permute.xlu0 %621
    %625 = vrot.lane.b32.xlu0 %v477, 112
    %v626 = vpop.permute.xlu0 %625
    %629 = vrot.lane.b32.xlu0 %v540, 16
    %v630 = vpop.permute.xlu0 %629
    %633 = vrot.lane.b32.xlu0 %v523, 32
    %v634 = vpop.permute.xlu0 %633
    %637 = vrot.lane.b32.xlu0 %v541, 48
    %v638 = vpop.permute.xlu0 %637
    %641 = vrot.lane.b32.xlu0 %v532, 64
    %v642 = vpop.permute.xlu0 %641
    %645 = vrot.lane.b32.xlu0 %v542, 80
    %v646 = vpop.permute.xlu0 %645
    %649 = vrot.lane.b32.xlu0 %v539, 96
    %v650 = vpop.permute.xlu0 %649
    %653 = vrot.lane.b32.xlu0 %v543, 112
    %v654 = vpop.permute.xlu0 %653
    %vm656 = vcmask 130048
    %v657 = vsel %vm656, %v318, %v546
    %vm658 = vcmask 261120
    %v659 = vsel %vm658, %v657, %v550
    %vm660 = vcmask 392192
    %v661 = vsel %vm660, %v659, %v554
    %vm662 = vcmask 523264
    %v663 = vsel %vm662, %v661, %v558
    %vm664 = vcmask 654336
    %v665 = vsel %vm664, %v663, %v562
    %vm666 = vcmask 785408
    %v667 = vsel %vm666, %v665, %v566
    %vm668 = vcmask 916480
    %v669 = vsel %vm668, %v667, %v570
    %v670 = vsel %vm656, %v384, %v574
    %v671 = vsel %vm658, %v670, %v578
    %v672 = vsel %vm660, %v671, %v582
    %v673 = vsel %vm662, %v672, %v586
    %v674 = vsel %vm664, %v673, %v590
    %v675 = vsel %vm666, %v674, %v594
    %v676 = vsel %vm668, %v675, %v598
    %v677 = vsel %vm656, %v450, %v602
    %v678 = vsel %vm658, %v677, %v606
    %v679 = vsel %vm660, %v678, %v610
    %v680 = vsel %vm662, %v679, %v614
    %v681 = vsel %vm664, %v680, %v618
    %v682 = vsel %vm666, %v681, %v622
    %v683 = vsel %vm668, %v682, %v626
    %v684 = vsel %vm656, %v516, %v630
    %v685 = vsel %vm658, %v684, %v634
    %v686 = vsel %vm660, %v685, %v638
    %v687 = vsel %vm662, %v686, %v642
    %v688 = vsel %vm664, %v687, %v646
    %v689 = vsel %vm666, %v688, %v650
    %v690 = vsel %vm668, %v689, %v654
    %v695 = vcombine.low %v669, %v676
    %v696 = vcombine.low %v683, %v690
    %v698 = vunpack.c.l.s4 1983009808
    %v699 = vunpack.c.0.s8 %v698
    %v700 = vlaneseq
    %v701 = vshrl.u32 %v700, 7
    %v702 = vsub.s32 %v699, %v701
    %v703 = vrot.slane %v695, %v702
    %v705 = vunpack.c.l.s4 1983009808
    %v706 = vunpack.c.0.s8 %v705
    %v707 = vlaneseq
    %v708 = vshrl.u32 %v707, 7
    %v709 = vsub.s32 %v706, %v708
    %v710 = vrot.slane %v696, %v709
    %v711 = vcombine.low %v703, %v710
    %713 = vst [vmem:[#allocation5] sm:$0xff] %v711
    // Predicated region
    $region10: #{tpu_custom_call.1} parent=1 // pred_check
      _
    $region11: #{tpu_custom_call.1} parent=1 // pred_check_branch
      %715 = sbr.rel (0) target = $region13
    $region12: #{tpu_custom_call.1} parent=1 // pred_region
      %s717 = ssub.s32 128, 128
      %718 = vsyncadd [#allocation4], %s717
      %s720 = sshll.u32 [#allocation5], 4
      %s721 = int_to_ptr.vmem [resolvable:$true] %s720
      %723 = dma.vmem_to_hbm [thread:$0]  %s721, 128, %s1, [#allocation4]
    $region13: #{tpu_custom_call.1} parent=1 // pred_fallthru
      _
    // Predicated region
    $region14: #{tpu_custom_call.1} parent=1 // pred_check
      _
    $region15: #{tpu_custom_call.1} parent=1 // pred_check_branch
      %725 = sbr.rel (0) target = $region17
    $region16: #{tpu_custom_call.1} parent=1 // pred_region
      %726 = dma.done [#allocation4], 128
    $region17: #{tpu_custom_call.1} parent=1 // pred_fallthru
      _
    %727 = vsyncpa [#allocation3], 1
    %728 = vsyncpa [#allocation4], 1

// kernel: tpu_custom_call.1
$region0: #{tpu_custom_call.1}
  #allocation0 [shape = 'u32[]', space=smem, size = 0x4, offset = 0x4, fixed_abs, tag = 'smem constant byte address 0x4 - core index']
  #allocation1 [shape = 'u32[144,128]{1,0:T(1,128)}', space=vmem, size = 0x12000, scoped, tag = 'internal scratch']
  %s0 = inlined_call_operand.hbm [shape: f32[2,16,32], index: 0, kind: input, shape index: {}]
  %s1 = inlined_call_operand.vmem [shape: f32[2,32,16], index: 1, kind: output, shape index: {}]
  %s2 = sld [smem:[#allocation0]]
  $region18: #{tpu_custom_call.1} parent=0
    _
  %s4 = ssub.s32 1, %s2
  %s5 = scalar_select 0, %s4, %s2
  $region1: #{tpu_custom_call.1} parent=0
    #allocation2 [shape = 'u8[16384]{0}', space=vmem, size = 0x4000, scoped, tag = 'input window, operand 0, single buffered']
    #allocation3 [shape = 's32[1]{0}', space=sflag, size = 0x4, scoped, tag = 'scoped memory for tpu_custom_call.1']
    %6 = vsyncpa [#allocation3], 0
    // Predicated region
    $region2: #{tpu_custom_call.1} parent=1 // pred_check
      _
    $region3: #{tpu_custom_call.1} parent=1 // pred_check_branch
      %8 = sbr.rel (0) target = $region5
    $region4: #{tpu_custom_call.1} parent=1 // pred_region
      %s10 = ssub.s32 512, 512
      %11 = vsyncadd [#allocation3], %s10
      %s12 = sshll.u32 [#allocation2], 4
      %s13 = int_to_ptr.vmem [resolvable:$true] %s12
      %18 = dma.hbm_to_vmem [thread:$0]  %s0, 512, %s13, [#allocation3], 128, 128, 8
    $region5: #{tpu_custom_call.1} parent=1 // pred_fallthru
      _
    // Predicated region
    $region6: #{tpu_custom_call.1} parent=1 // pred_check
      _
    $region7: #{tpu_custom_call.1} parent=1 // pred_check_branch
      %20 = sbr.rel (0) target = $region9
    $region8: #{tpu_custom_call.1} parent=1 // pred_region
      %21 = dma.done [#allocation3], 512
    $region9: #{tpu_custom_call.1} parent=1 // pred_fallthru
      _
    %v22 = vld [vmem:[#allocation2] sm:$0xff]
    %v23 = vld [vmem:[#allocation2 + $0x8] sm:$0xff]
    %v24 = vld [vmem:[#allocation2 + $0x10] sm:$0xff]
    %v25 = vld [vmem:[#allocation2 + $0x18] sm:$0xff]
    %26 = vxpose.xlu0.b32.start [1/16] %v22, 128
    %27 = vxpose.xlu0.b32.cont [2/16] %v23, 128
    %28 = vxpose.xlu0.b32.cont [3/16] 0.0, 128
    %29 = vxpose.xlu0.b32.cont [4/16] 0.0, 128
    %30 = vxpose.xlu0.b32.cont [5/16] 0.0, 128
    %31 = vxpose.xlu0.b32.cont [6/16] 0.0, 128
    %32 = vxpose.xlu0.b32.cont [7/16] 0.0, 128
    %33 = vxpose.xlu0.b32.cont [8/16] 0.0, 128
    %34 = vxpose.xlu0.b32.cont [9/16] 0.0, 128
    %35 = vxpose.xlu0.b32.cont [10/16] 0.0, 128
    %36 = vxpose.xlu0.b32.cont [11/16] 0.0, 128
    %37 = vxpose.xlu0.b32.cont [12/16] 0.0, 128
    %38 = vxpose.xlu0.b32.cont [13/16] 0.0, 128
    %39 = vxpose.xlu0.b32.cont [14/16] 0.0, 128
    %40 = vxpose.xlu0.b32.cont [15/16] 0.0, 128
    %41 = vxpose.xlu0.b32.end [16/16] 0.0, 128
    %v42 = vpop.trf.xlu0
    %v43 = vpop.trf.xlu0
    %v44 = vpop.trf.xlu0
    %v45 = vpop.trf.xlu0
    %v46 = vpop.trf.xlu0
    %v47 = vpop.trf.xlu0
    %v48 = vpop.trf.xlu0
    %v49 = vpop.trf.xlu0
    %v50 = vpop.trf.xlu0
    %v51 = vpop.trf.xlu0
    %v52 = vpop.trf.xlu0
    %v53 = vpop.trf.xlu0
    %v54 = vpop.trf.xlu0
    %v55 = vpop.trf.xlu0
    %v56 = vpop.trf.xlu0
    %v57 = vpop.trf.xlu0
    %58 = vxpose.xlu0.b32.start [1/16] %v24, 128
    %59 = vxpose.xlu0.b32.cont [2/16] %v25, 128
    %60 = vxpose.xlu0.b32.cont [3/16] 0.0, 128
    %61 = vxpose.xlu0.b32.cont [4/16] 0.0, 128
    %62 = vxpose.xlu0.b32.cont [5/16] 0.0, 128
    %63 = vxpose.xlu0.b32.cont [6/16] 0.0, 128
    %64 = vxpose.xlu0.b32.cont [7/16] 0.0, 128
    %65 = vxpose.xlu0.b32.cont [8/16] 0.0, 128
    %66 = vxpose.xlu0.b32.cont [9/16] 0.0, 128
    %67 = vxpose.xlu0.b32.cont [10/16] 0.0, 128
    %68 = vxpose.xlu0.b32.cont [11/16] 0.0, 128
    %69 = vxpose.xlu0.b32.cont [12/16] 0.0, 128
    %70 = vxpose.xlu0.b32.cont [13/16] 0.0, 128
    %71 = vxpose.xlu0.b32.cont [14/16] 0.0, 128
    %72 = vxpose.xlu0.b32.cont [15/16] 0.0, 128
    %73 = vxpose.xlu0.b32.end [16/16] 0.0, 128
    %v74 = vpop.trf.xlu0
    %v75 = vpop.trf.xlu0
    %v76 = vpop.trf.xlu0
    %v77 = vpop.trf.xlu0
    %v78 = vpop.trf.xlu0
    %v79 = vpop.trf.xlu0
    %v80 = vpop.trf.xlu0
    %v81 = vpop.trf.xlu0
    %v82 = vpop.trf.xlu0
    %v83 = vpop.trf.xlu0
    %v84 = vpop.trf.xlu0
    %v85 = vpop.trf.xlu0
    %v86 = vpop.trf.xlu0
    %v87 = vpop.trf.xlu0
    %v88 = vpop.trf.xlu0
    %v89 = vpop.trf.xlu0
    %vm90 = vcmask 130048
    %91 = vst.msk [vmem:[%s1] sm:$0xff] %vm90, %v42
    %92 = vst.msk [vmem:[%s1 + $0x8] sm:$0xff] %vm90, %v43
    %93 = vst.msk [vmem:[%s1 + $0x10] sm:$0xff] %vm90, %v44
    %94 = vst.msk [vmem:[%s1 + $0x18] sm:$0xff] %vm90, %v45
    %95 = vst.msk [vmem:[%s1 + $0x20] sm:$0xff] %vm90, %v74
    %96 = vst.msk [vmem:[%s1 + $0x28] sm:$0xff] %vm90, %v75
    %97 = vst.msk [vmem:[%s1 + $0x30] sm:$0xff] %vm90, %v76
    %98 = vst.msk [vmem:[%s1 + $0x38] sm:$0xff] %vm90, %v77
    // Predicated region
    $region10: #{tpu_custom_call.1} parent=1 // pred_check
      _
    $region11: #{tpu_custom_call.1} parent=1 // pred_check_branch
      %100 = sbr.rel (0) target = $region13
    $region12: #{tpu_custom_call.1} parent=1 // pred_region
      _
    $region13: #{tpu_custom_call.1} parent=1 // pred_fallthru
      _
    // Predicated region
    $region14: #{tpu_custom_call.1} parent=1 // pred_check
      _
    $region15: #{tpu_custom_call.1} parent=1 // pred_check_branch
      %102 = sbr.rel (0) target = $region17
    $region16: #{tpu_custom_call.1} parent=1 // pred_region
      _
    $region17: #{tpu_custom_call.1} parent=1 // pred_fallthru
      _
    %103 = vsyncpa [#allocation3], 1

</llo_original>
